<compile_context>
chip_gen: v6e
topology: v6e:2x2x1
jax: 0.10.0
libtpu: 0.0.40
codegen_flags: <defaults>
</compile_context>

<pallas_src>
import math

import jax
import jax.numpy as jnp
from jax import lax
from jax.experimental import pallas as pl
from jax.experimental.pallas import tpu as pltpu

_INV_SQRT2 = 1.0 / math.sqrt(2.0)


def _round_up(x, m):
    return (x + m - 1) // m * m


def _geglu_epilogue(acc, out_dtype):
    """acc: (tm, 2*tn) f32, packed [value | gate]. Returns (tm, tn) out_dtype."""
    tn = acc.shape[-1] // 2
    h = acc[:, :tn]
    g = acc[:, tn:]
    gelu_g = 0.5 * g * (1.0 + lax.erf(g * _INV_SQRT2))   # exact torch GELU
    return (h * gelu_g).astype(out_dtype)


def _geglu_kernel_fused(x_ref, w_ref, b_ref, o_ref):
    # Single-K-step path: x_ref (tm, K), w_ref (K, 2*tn), b_ref (1, 2*tn).
    acc = jnp.dot(x_ref[...], w_ref[...], preferred_element_type=jnp.float32)
    o_ref[...] = _geglu_epilogue(acc + b_ref[...], o_ref.dtype)


def _geglu_kernel_ktiled(x_ref, w_ref, b_ref, o_ref, acc_ref):
    # K-tiled path: acc_ref (tm, 2*tn) f32 scratch resident across the K axis.
    k = pl.program_id(2)

    @pl.when(k == 0)
    def _init():
        acc_ref[...] = jnp.zeros_like(acc_ref)

    acc_ref[...] += jnp.dot(
        x_ref[...], w_ref[...], preferred_element_type=jnp.float32
    )

    @pl.when(k == pl.num_programs(2) - 1)
    def _finalize():
        o_ref[...] = _geglu_epilogue(acc_ref[...] + b_ref[...], o_ref.dtype)


def _choose_k_tiling(dim_in, tk):
    """Pick (tk_eff, k_pad). Single K step when dim_in <= tk; otherwise a
    128-multiple K tile that minimizes zero padding."""
    if dim_in <= tk:
        return dim_in, dim_in
    nk = (dim_in + tk - 1) // tk
    tk_eff = _round_up((dim_in + nk - 1) // nk, 128)
    return tk_eff, _round_up(dim_in, tk_eff)


def prepare_geglu_params(weight, bias, *, tn=256, tk=2048,
                         compute_dtype=jnp.bfloat16):
    """One-time parameter prep (call at module init, NOT per forward).

    weight: (2*dim_out, dim_in), bias: (2*dim_out,)  -- torch.nn.Linear layout.
    Returns (w_packed, b_packed, dim_out, tn_eff, tk_eff):
      w_packed: (k_pad, 2*n_pad) in compute_dtype; per N-tile j the columns are
                [value cols of tile j | gate cols of tile j].
      b_packed: (1, 2*n_pad) float32, same per-tile layout.
    """
    two_dim_out, dim_in = weight.shape
    dim_out = two_dim_out // 2

    tn_eff = min(tn, _round_up(dim_out, 128))      # lane-dense output tiles
    tk_eff, k_pad = _choose_k_tiling(dim_in, tk)
    n_pad = _round_up(dim_out, tn_eff)
    nt = n_pad // tn_eff

    w = weight.astype(jnp.float32)
    w_x = w[:dim_out].T                            # (dim_in, dim_out) value half
    w_g = w[dim_out:].T                            # (dim_in, dim_out) gate half
    b_x = bias[:dim_out].astype(jnp.float32)
    b_g = bias[dim_out:].astype(jnp.float32)

    if n_pad != dim_out:
        w_x = jnp.pad(w_x, ((0, 0), (0, n_pad - dim_out)))
        w_g = jnp.pad(w_g, ((0, 0), (0, n_pad - dim_out)))
        b_x = jnp.pad(b_x, (0, n_pad - dim_out))
        b_g = jnp.pad(b_g, (0, n_pad - dim_out))
    if k_pad != dim_in:
        w_x = jnp.pad(w_x, ((0, k_pad - dim_in), (0, 0)))
        w_g = jnp.pad(w_g, ((0, k_pad - dim_in), (0, 0)))

    # Interleave value/gate halves per N tile so the kernel needs a single matmul.
    w_packed = jnp.stack(
        [w_x.reshape(k_pad, nt, tn_eff), w_g.reshape(k_pad, nt, tn_eff)], axis=2,
    ).reshape(k_pad, nt * 2 * tn_eff).astype(compute_dtype)
    b_packed = jnp.stack(
        [b_x.reshape(nt, tn_eff), b_g.reshape(nt, tn_eff)], axis=1,
    ).reshape(1, nt * 2 * tn_eff)

    return w_packed, b_packed, dim_out, tn_eff, tk_eff


def geglu_apply(x, w_packed, b_packed, dim_out, tn_eff, tk_eff, *, tm=256):
    """x: (..., dim_in) -> (..., dim_out) using pre-packed parameters."""
    *lead, dim_in = x.shape
    compute_dtype = w_packed.dtype
    out_dtype = x.dtype

    x2d = x.reshape(-1, dim_in)
    M = x2d.shape[0]
    tm_eff = min(tm, _round_up(M, 8))              # shrink only for tiny inputs
    m_pad = _round_up(M, tm_eff)

    k_pad = w_packed.shape[0]
    n_pad = w_packed.shape[1] // 2
    nt = n_pad // tn_eff
    nk = k_pad // tk_eff

    xp = x2d.astype(compute_dtype)
    if m_pad != M or k_pad != dim_in:
        xp = jnp.pad(xp, ((0, m_pad - M), (0, k_pad - dim_in)))

    cbytes = jnp.dtype(compute_dtype).itemsize
    obytes = jnp.dtype(out_dtype).itemsize
    cost = pl.CostEstimate(
        flops=2 * m_pad * k_pad * 2 * n_pad + 6 * m_pad * n_pad,
        transcendentals=m_pad * n_pad,
        bytes_accessed=(m_pad * k_pad * cbytes + k_pad * 2 * n_pad * cbytes
                        + 2 * n_pad * 4 + m_pad * n_pad * obytes),
    )

    if nk == 1:
        # Fused single-pass kernel: no accumulator scratch, no pl.when.
        grid = (m_pad // tm_eff, nt)
        in_specs = [
            pl.BlockSpec((tm_eff, k_pad), lambda i, j: (i, 0)),
            pl.BlockSpec((k_pad, 2 * tn_eff), lambda i, j: (0, j)),
            pl.BlockSpec((1, 2 * tn_eff), lambda i, j: (0, j)),
        ]
        out_spec = pl.BlockSpec((tm_eff, tn_eff), lambda i, j: (i, j))
        scratch = []
        semantics = ("parallel", "parallel")
        kernel = _geglu_kernel_fused
        tk_blk = k_pad
    else:
        grid = (m_pad // tm_eff, nt, nk)
        in_specs = [
            pl.BlockSpec((tm_eff, tk_eff), lambda i, j, k: (i, k)),
            pl.BlockSpec((tk_eff, 2 * tn_eff), lambda i, j, k: (k, j)),
            pl.BlockSpec((1, 2 * tn_eff), lambda i, j, k: (0, j)),
        ]
        out_spec = pl.BlockSpec((tm_eff, tn_eff), lambda i, j, k: (i, j))
        scratch = [pltpu.VMEM((tm_eff, 2 * tn_eff), jnp.float32)]
        semantics = ("parallel", "parallel", "arbitrary")
        kernel = _geglu_kernel_ktiled
        tk_blk = tk_eff

    # Double-buffered pipeline blocks (+ f32 accumulator scratch if K-tiled).
    vmem_needed = 2 * (tm_eff * tk_blk * cbytes            # x block
                       + tk_blk * 2 * tn_eff * cbytes      # packed weight block
                       + 2 * tn_eff * 4                    # packed bias block
                       + tm_eff * tn_eff * obytes)         # output block
    if nk > 1:
        vmem_needed += tm_eff * 2 * tn_eff * 4              # accumulator scratch
    # Cap at 64 MiB so the same setting is valid on v7x (64 MiB VMEM) as well.
    vmem_limit = int(min(64 * 2**20, max(32 * 2**20, 2 * vmem_needed)))

    out2d = pl.pallas_call(
        kernel,
        out_shape=jax.ShapeDtypeStruct((m_pad, n_pad), out_dtype),
        grid_spec=pltpu.PrefetchScalarGridSpec(
            num_scalar_prefetch=0,
            grid=grid,
            in_specs=in_specs,
            out_specs=out_spec,
            scratch_shapes=scratch,
        ),
        compiler_params=pltpu.CompilerParams(
            dimension_semantics=semantics,
            vmem_limit_bytes=vmem_limit,
        ),
        cost_estimate=cost,
    )(xp, w_packed, b_packed)

    out2d = out2d[:M, :dim_out]
    return out2d.reshape(*lead, dim_out)


def geglu(x, weight, bias, *, tm=256, tn=256, tk=2048,
          compute_dtype=jnp.bfloat16):
    """Convenience wrapper. In a real module, hoist prepare_geglu_params()
    to init time and call geglu_apply() in the hot path."""
    params = prepare_geglu_params(
        weight, bias, tn=tn, tk=tk, compute_dtype=compute_dtype)
    return geglu_apply(x, *params, tm=tm)


def _ref_geglu(x, weight, bias, dim_out):
    proj = x @ weight.T + bias
    h, g = proj[..., :dim_out], proj[..., dim_out:]
    return h * (0.5 * g * (1.0 + lax.erf(g * _INV_SQRT2)))


if __name__ == "__main__":
    batch, seq, dim_in, dim_out = 2, 8, 64, 128

    key = jax.random.PRNGKey(0)
    kx, kw, kb = jax.random.split(key, 3)

    x = jax.random.normal(kx, (batch, seq, dim_in), dtype=jnp.float32)

    # Deterministic nn.Linear-style init: U(-1/sqrt(dim_in), 1/sqrt(dim_in))
    bound = 1.0 / math.sqrt(dim_in)
    weight = jax.random.uniform(kw, (2 * dim_out, dim_in),
                                minval=-bound, maxval=bound, dtype=jnp.float32)
    bias = jax.random.uniform(kb, (2 * dim_out,),
                              minval=-bound, maxval=bound, dtype=jnp.float32)

    ref = _ref_geglu(x, weight, bias, dim_out)

    # 1) f32 compute path (fused single-K kernel): tight numerical check.
    out_f32 = jax.block_until_ready(geglu(x, weight, bias,
                                          compute_dtype=jnp.float32))
    assert out_f32.shape == (batch, seq, dim_out)
    assert jnp.allclose(out_f32, ref, atol=1e-4, rtol=1e-4), \
        float(jnp.max(jnp.abs(out_f32 - ref)))

    # 2) Default bf16 MXU path with params prepared once (hoisted out of the
    #    hot path); looser tolerance due to bf16 input rounding.
    params_bf16 = prepare_geglu_params(weight, bias)      # "module init"
    out_bf16 = jax.block_until_ready(geglu_apply(x, *params_bf16))
    assert out_bf16.shape == (batch, seq, dim_out)
    assert jnp.allclose(out_bf16, ref, atol=3e-2, rtol=3e-2), \
        float(jnp.max(jnp.abs(out_bf16 - ref)))

    # 3) Exercise the K-tiled accumulator path (dim_in > tk), f32 compute.
    dim_in2 = 256
    kx2, kw2, kb2 = jax.random.split(jax.random.PRNGKey(1), 3)
    x2 = jax.random.normal(kx2, (batch, seq, dim_in2), dtype=jnp.float32)
    bound2 = 1.0 / math.sqrt(dim_in2)
    weight2 = jax.random.uniform(kw2, (2 * dim_out, dim_in2),
                                 minval=-bound2, maxval=bound2,
                                 dtype=jnp.float32)
    bias2 = jax.random.uniform(kb2, (2 * dim_out,),
                               minval=-bound2, maxval=bound2,
                               dtype=jnp.float32)
    ref2 = _ref_geglu(x2, weight2, bias2, dim_out)
    out2 = jax.block_until_ready(
        geglu(x2, weight2, bias2, tk=128, compute_dtype=jnp.float32))
    assert out2.shape == (batch, seq, dim_out)
    assert jnp.allclose(out2, ref2, atol=1e-4, rtol=1e-4), \
        float(jnp.max(jnp.abs(out2 - ref2)))

    print("KERNEL_OK")
</pallas_src>

<mosaic_0001>
module attributes {stable_mosaic.version = 11 : i64} {
  func.func @_geglu_kernel_fused(%arg0: i32, %arg1: i32, %arg2: memref<16x64xf32, #tpu.memory_space<vmem>>, %arg3: memref<64x256xf32, #tpu.memory_space<vmem>>, %arg4: memref<1x256xf32, #tpu.memory_space<vmem>>, %arg5: memref<16x128xf32, #tpu.memory_space<vmem>>) attributes {dimension_semantics = [#tpu.dimension_semantics<parallel>, #tpu.dimension_semantics<parallel>], iteration_bounds = array<i64: 1, 1>, scalar_prefetch = 0 : i64, scratch_operands = 0 : i64, tpu.core_type = #tpu.core_type<tc>, window_params = [{transform_indices = @transform_0, window_bounds = array<i64: 16, 64>}, {transform_indices = @transform_1, window_bounds = array<i64: 64, 256>}, {transform_indices = @transform_2, window_bounds = array<i64: 1, 256>}, {transform_indices = @transform_3, window_bounds = array<i64: 16, 128>}]} {
    %c0 = arith.constant 0 : index
    %c0_0 = arith.constant 0 : index
    %0 = vector.load %arg2[%c0, %c0_0] : memref<16x64xf32, #tpu.memory_space<vmem>>, vector<16x64xf32>
    %c0_1 = arith.constant 0 : index
    %c0_2 = arith.constant 0 : index
    %1 = vector.load %arg3[%c0_1, %c0_2] : memref<64x256xf32, #tpu.memory_space<vmem>>, vector<64x256xf32>
    %cst = arith.constant dense<0.000000e+00> : vector<16x256xf32>
    %2 = tpu.matmul %0, %1, %cst {dimension_numbers = #tpu.dot_dimension_numbers<[1], [0], [0], [1], [0, 0, 1, 1], [], []>} : vector<16x64xf32>, vector<64x256xf32>, vector<16x256xf32> -> vector<16x256xf32>
    %c0_3 = arith.constant 0 : index
    %c0_4 = arith.constant 0 : index
    %3 = vector.load %arg4[%c0_3, %c0_4] : memref<1x256xf32, #tpu.memory_space<vmem>>, vector<1x256xf32>
    %4 = vector.broadcast %3 : vector<1x256xf32> to vector<16x256xf32>
    %5 = arith.addf %2, %4 : vector<16x256xf32>
    %6 = vector.extract_strided_slice %5 {offsets = [0, 0], sizes = [16, 128], strides = [1, 1]} : vector<16x256xf32> to vector<16x128xf32>
    %7 = vector.extract_strided_slice %5 {offsets = [0, 128], sizes = [16, 128], strides = [1, 1]} : vector<16x256xf32> to vector<16x128xf32>
    %cst_5 = arith.constant 5.000000e-01 : f32
    %8 = vector.broadcast %cst_5 : f32 to vector<16x128xf32>
    %9 = arith.mulf %8, %7 : vector<16x128xf32>
    %cst_6 = arith.constant 0.707106769 : f32
    %10 = vector.broadcast %cst_6 : f32 to vector<16x128xf32>
    %11 = arith.mulf %7, %10 : vector<16x128xf32>
    %12 = math.erf %11 : vector<16x128xf32>
    %cst_7 = arith.constant 1.000000e+00 : f32
    %13 = vector.broadcast %cst_7 : f32 to vector<16x128xf32>
    %14 = arith.addf %13, %12 : vector<16x128xf32>
    %15 = arith.mulf %9, %14 : vector<16x128xf32>
    %16 = arith.mulf %6, %15 : vector<16x128xf32>
    %c0_8 = arith.constant 0 : index
    %c0_9 = arith.constant 0 : index
    %17 = vector.load %arg5[%c0_8, %c0_9] : memref<16x128xf32, #tpu.memory_space<vmem>>, vector<16x128xf32>
    tpu.vector_store %arg5[%c0_8, %c0_9], %16 {strides = array<i32>} : memref<16x128xf32, #tpu.memory_space<vmem>>, vector<16x128xf32>,
    return
  }
  func.func @transform_0(%arg0: i32, %arg1: i32) -> (i32, i32) {
    %c0_i32 = arith.constant 0 : i32
    %c0_i32_0 = arith.constant 0 : i32
    return %arg0, %c0_i32 : i32, i32
  }
  func.func @transform_1(%arg0: i32, %arg1: i32) -> (i32, i32) {
    %c0_i32 = arith.constant 0 : i32
    %c0_i32_0 = arith.constant 0 : i32
    return %c0_i32, %arg1 : i32, i32
  }
  func.func @transform_2(%arg0: i32, %arg1: i32) -> (i32, i32) {
    %c0_i32 = arith.constant 0 : i32
    %c0_i32_0 = arith.constant 0 : i32
    return %c0_i32, %arg1 : i32, i32
  }
  func.func @transform_3(%arg0: i32, %arg1: i32) -> (i32, i32) {
    %c0_i32 = arith.constant 0 : i32
    return %arg0, %arg1 : i32, i32
  }
}

</mosaic_0001>

<llo_original>
// kernel: tpu_custom_call.1
$region0: #{tpu_custom_call.1}
  #allocation0 [shape = 'u32[]', space=smem, size = 0x4, offset = 0x4, fixed_abs, tag = 'smem constant byte address 0x4 - core index']
  #allocation1 [shape = 'u32[144,128]{1,0:T(1,128)}', space=vmem, size = 0x12000, scoped, tag = 'internal scratch']
  %s0 = inlined_call_operand.hbm [shape: f32[16,64], index: 0, kind: input, shape index: {}]
  %s1 = inlined_call_operand.hbm [shape: f32[64,256], index: 1, kind: input, shape index: {}]
  %s2 = inlined_call_operand.vmem [shape: f32[1,256], index: 2, kind: input, shape index: {}]
  %s3 = inlined_call_operand.hbm [shape: f32[16,128], index: 3, kind: output, shape index: {}]
  %s4 = sld [smem:[#allocation0]]
  $region30: #{tpu_custom_call.1} parent=0
    _
  %s6 = ssub.s32 1, %s4
  %s7 = scalar_select 0, %s6, %s4
  $region1: #{tpu_custom_call.1} parent=0
    #allocation2 [shape = 'u8[8192]{0}', space=vmem, size = 0x2000, scoped, tag = 'input window, operand 0, single buffered']
    #allocation3 [shape = 's32[1]{0}', space=sflag, size = 0x4, scoped, tag = 'scoped memory for tpu_custom_call.1']
    #allocation4 [shape = 's32[1]{0}', space=sflag, size = 0x4, scoped, tag = 'scoped memory for tpu_custom_call.1']
    #allocation5 [shape = 'u8[65536]{0}', space=vmem, size = 0x10000, scoped, tag = 'input window, operand 1, single buffered']
    #allocation6 [shape = 's32[1]{0}', space=sflag, size = 0x4, scoped, tag = 'scoped memory for tpu_custom_call.1']
    #allocation7 [shape = 'u8[8192]{0}', space=vmem, size = 0x2000, scoped, tag = 'output window, operand 0, single buffered']
    %8 = vsyncpa [#allocation3], 0
    %9 = vsyncpa [#allocation6], 0
    %10 = vsyncpa [#allocation4], 0
    // Predicated region
    $region2: #{tpu_custom_call.1} parent=1 // pred_check
      _
    $region3: #{tpu_custom_call.1} parent=1 // pred_check_branch
      %12 = sbr.rel (0) target = $region5
    $region4: #{tpu_custom_call.1} parent=1 // pred_region
      %s14 = ssub.s32 256, 256
      %15 = vsyncadd [#allocation3], %s14
      %s16 = sshll.u32 [#allocation2], 4
      %s17 = int_to_ptr.vmem [resolvable:$true] %s16
      %22 = dma.hbm_to_vmem [thread:$0]  %s0, 256, %s17, [#allocation3], 128, 128, 8
    $region5: #{tpu_custom_call.1} parent=1 // pred_fallthru
      _
    // Predicated region
    $region6: #{tpu_custom_call.1} parent=1 // pred_check
      _
    $region7: #{tpu_custom_call.1} parent=1 // pred_check_branch
      %24 = sbr.rel (0) target = $region9
    $region8: #{tpu_custom_call.1} parent=1 // pred_region
      %s26 = ssub.s32 2048, 2048
      %27 = vsyncadd [#allocation6], %s26
      %s28 = sshll.u32 [#allocation5], 4
      %s29 = int_to_ptr.vmem [resolvable:$true] %s28
      %34 = dma.hbm_to_vmem [thread:$0]  %s1, 2048, %s29, [#allocation6], 256, 256, 16
    $region9: #{tpu_custom_call.1} parent=1 // pred_fallthru
      _
    // Predicated region
    $region10: #{tpu_custom_call.1} parent=1 // pred_check
      _
    $region11: #{tpu_custom_call.1} parent=1 // pred_check_branch
      %36 = sbr.rel (0) target = $region13
    $region12: #{tpu_custom_call.1} parent=1 // pred_region
      _
    $region13: #{tpu_custom_call.1} parent=1 // pred_fallthru
      _
    // Predicated region
    $region14: #{tpu_custom_call.1} parent=1 // pred_check
      _
    $region15: #{tpu_custom_call.1} parent=1 // pred_check_branch
      %38 = sbr.rel (0) target = $region17
    $region16: #{tpu_custom_call.1} parent=1 // pred_region
      %39 = dma.done [#allocation3], 256
    $region17: #{tpu_custom_call.1} parent=1 // pred_fallthru
      _
    // Predicated region
    $region18: #{tpu_custom_call.1} parent=1 // pred_check
      _
    $region19: #{tpu_custom_call.1} parent=1 // pred_check_branch
      %41 = sbr.rel (0) target = $region21
    $region20: #{tpu_custom_call.1} parent=1 // pred_region
      %42 = dma.done [#allocation6], 2048
    $region21: #{tpu_custom_call.1} parent=1 // pred_fallthru
      _
    %v43 = vld [vmem:[#allocation2] sm:$0xff]
    %v44 = vld [vmem:[#allocation2 + $0x8] sm:$0xff]
    %v45 = vld [vmem:[#allocation5] sm:$0xff]
    %v46 = vld [vmem:[#allocation5 + $0x8] sm:$0xff]
    %v47 = vld [vmem:[#allocation5 + $0x10] sm:$0xff]
    %v48 = vld [vmem:[#allocation5 + $0x18] sm:$0xff]
    %v49 = vld [vmem:[#allocation5 + $0x20] sm:$0xff]
    %v50 = vld [vmem:[#allocation5 + $0x28] sm:$0xff]
    %v51 = vld [vmem:[#allocation5 + $0x30] sm:$0xff]
    %v52 = vld [vmem:[#allocation5 + $0x38] sm:$0xff]
    %v53 = vld [vmem:[#allocation5 + $0x40] sm:$0xff]
    %v54 = vld [vmem:[#allocation5 + $0x48] sm:$0xff]
    %v55 = vld [vmem:[#allocation5 + $0x50] sm:$0xff]
    %v56 = vld [vmem:[#allocation5 + $0x58] sm:$0xff]
    %v57 = vld [vmem:[#allocation5 + $0x60] sm:$0xff]
    %v58 = vld [vmem:[#allocation5 + $0x68] sm:$0xff]
    %v59 = vld [vmem:[#allocation5 + $0x70] sm:$0xff]
    %v60 = vld [vmem:[#allocation5 + $0x78] sm:$0xff]
    %v61 = vld [vmem:[%s2] sm:$0x3]
    %v63 = vlaneseq
    %v64 = vshrl.u32 %v63, 7
    %v65 = vsub.s32 0, %v64
    %v66 = vrot.slane %v61, %v65
    %v67 = vlaneseq
    %v68 = vshrl.u32 %v67, 7
    %v69 = vsub.s32 1, %v68
    %v70 = vrot.slane %v61, %v69
    %vm73 = vcmask 523264
    %v75 = vsel %vm73, %v43, 0
    %v78 = vsel %vm73, %v44, 0
    %80 = vmatprep.subr.mxu0 0.0
    %81 = vmatpush1.msra.mxu0 0.0
    %82 = vmatprep.subr.mxu0 0.0
    %83 = vmatpush1.msra.mxu0 0.0
    %84 = vmatprep.subr.mxu0 0.0
    %85 = vmatpush1.msra.mxu0 0.0
    %86 = vmatprep.subr.mxu0 0.0
    %87 = vmatpush1.msra.mxu0 0.0
    %88 = vmatprep.subr.mxu0 0.0
    %89 = vmatpush1.msra.mxu0 0.0
    %90 = vmatprep.subr.mxu0 0.0
    %91 = vmatpush1.msra.mxu0 0.0
    %92 = vmatprep.subr.mxu0 0.0
    %93 = vmatpush1.msra.mxu0 0.0
    %94 = vmatprep.subr.mxu0 0.0
    %95 = vmatpush1.msra.mxu0 0.0
    %96 = vmatprep.subr.mxu0 %v60
    %97 = vmatpush1.msra.mxu0 %v59
    %98 = vmatprep.subr.mxu0 %v58
    %99 = vmatpush1.msra.mxu0 %v57
    %100 = vmatprep.subr.mxu0 %v56
    %101 = vmatpush1.msra.mxu0 %v55
    %102 = vmatprep.subr.mxu0 %v54
    %103 = vmatpush1.msra.mxu0 %v53
    %104 = vmatprep.subr.mxu0 %v52
    %105 = vmatpush1.msra.mxu0 %v51
    %106 = vmatprep.subr.mxu0 %v50
    %107 = vmatpush1.msra.mxu0 %v49
    %108 = vmatprep.subr.mxu0 %v48
    %109 = vmatpush1.msra.mxu0 %v47
    %110 = vmatprep.subr.mxu0 %v46
    %111 = vmatpush1.msra.mxu0 %v45
    %112 = vmatprep.subr.mxu0 0.0
    %113 = vmatpush2.msra.mxu0 0.0
    %114 = vmatprep.subr.mxu0 0.0
    %115 = vmatpush2.msra.mxu0 0.0
    %116 = vmatprep.subr.mxu0 0.0
    %117 = vmatpush2.msra.mxu0 0.0
    %118 = vmatprep.subr.mxu0 0.0
    %119 = vmatpush2.msra.mxu0 0.0
    %120 = vmatprep.subr.mxu0 0.0
    %121 = vmatpush2.msra.mxu0 0.0
    %122 = vmatprep.subr.mxu0 0.0
    %123 = vmatpush2.msra.mxu0 0.0
    %124 = vmatprep.subr.mxu0 0.0
    %125 = vmatpush2.msra.mxu0 0.0
    %126 = vmatprep.subr.mxu0 0.0
    %127 = vmatpush2.msra.mxu0 0.0
    %128 = vmatprep.subr.mxu0 0.0
    %129 = vmatpush2.msra.mxu0 0.0
    %130 = vmatprep.subr.mxu0 0.0
    %131 = vmatpush2.msra.mxu0 0.0
    %132 = vmatprep.subr.mxu0 0.0
    %133 = vmatpush2.msra.mxu0 0.0
    %134 = vmatprep.subr.mxu0 0.0
    %135 = vmatpush2.msra.mxu0 0.0
    %136 = vmatprep.subr.mxu0 0.0
    %137 = vmatpush2.msra.mxu0 0.0
    %138 = vmatprep.subr.mxu0 0.0
    %139 = vmatpush2.msra.mxu0 0.0
    %140 = vmatprep.subr.mxu0 0.0
    %141 = vmatpush2.msra.mxu0 0.0
    %142 = vmatprep.subr.mxu0 0.0
    %143 = vmatpush2.msra.mxu0 0.0
    %144 = vmatprep.mubr.f32.mxu0 0.0
    %145 = vmatmul.mubr.f32.gmra.mxu0 %v75
    %v146 = vpop.f32.mrf.mxu0
    %v147 = vadd.f32 %v66, %v146
    %v148 = vpop.f32.mrf.mxu0
    %v149 = vadd.f32 %v70, %v148
    %150 = vmatprep.mubr.f32.mxu0 0.0
    %151 = vmatmul.mubr.f32.gmra.mxu0 %v78
    %v152 = vpop.f32.mrf.mxu0
    %v153 = vadd.f32 %v66, %v152
    %v154 = vpop.f32.mrf.mxu0
    %v155 = vadd.f32 %v70, %v154
    %156 = vdwg.mxu0
    %v157 = vmul.f32 %v149, 0.5
    %v158 = vmul.f32 %v155, 0.5
    %v159 = vmul.f32 %v149, 0.70710677
    %v160 = vmul.f32 %v155, 0.70710677
    %v161 = verf.f32.pop %v159
    %v162 = verf.f32.pop %v160
    %v163 = vadd.f32 %v161, 1.0
    %v164 = vadd.f32 %v162, 1.0
    %v165 = vmul.f32 %v157, %v163
    %v166 = vmul.f32 %v158, %v164
    %v167 = vmul.f32 %v147, %v165
    %v168 = vmul.f32 %v153, %v166
    %169 = vst [vmem:[#allocation7] sm:$0xff] %v167
    %170 = vst [vmem:[#allocation7 + $0x8] sm:$0xff] %v168
    // Predicated region
    $region22: #{tpu_custom_call.1} parent=1 // pred_check
      _
    $region23: #{tpu_custom_call.1} parent=1 // pred_check_branch
      %172 = sbr.rel (0) target = $region25
    $region24: #{tpu_custom_call.1} parent=1 // pred_region
      %s174 = ssub.s32 256, 256
      %175 = vsyncadd [#allocation4], %s174
      %s176 = sshll.u32 [#allocation7], 4
      %s177 = int_to_ptr.vmem [resolvable:$true] %s176
      %182 = dma.vmem_to_hbm [thread:$0]  %s177, 256, %s3, [#allocation4], 128, 128, 8
    $region25: #{tpu_custom_call.1} parent=1 // pred_fallthru
      _
    // Predicated region
    $region26: #{tpu_custom_call.1} parent=1 // pred_check
      _
    $region27: #{tpu_custom_call.1} parent=1 // pred_check_branch
      %184 = sbr.rel (0) target = $region29
    $region28: #{tpu_custom_call.1} parent=1 // pred_region
      %185 = dma.done [#allocation4], 256
    $region29: #{tpu_custom_call.1} parent=1 // pred_fallthru
      _
    %186 = vsyncpa [#allocation3], 1
    %187 = vsyncpa [#allocation6], 1
    %188 = vsyncpa [#allocation4], 1

</llo_original>
